<compile_context>
chip_gen: v5e
topology: v5e:2x2
jax: 0.10.0
libtpu: 0.0.40
codegen_flags: <defaults>
</compile_context>

<pallas_src>
import math
import jax
import jax.numpy as jnp
from jax.experimental import pallas as pl
from jax.experimental.pallas import tpu as pltpu

# ----------------------------- config -------------------------------------
BATCH = 2
SEQ = 8
D_MODEL = 32
N_HEADS = 4
D_KV = 8
INNER = N_HEADS * D_KV          # 32
BS = BATCH * SEQ                # 16 — all batch tokens processed as one row block
NUM_BUCKETS = 32
MAX_DISTANCE = 128
EPS = 1e-6                      # layer_norm_epsilon
NEG_INF = -1e9                  # cross-batch mask value inside the packed bias

# Params-slab row layout (leading dim of the (5H, 32, 32) f32 slab):
ROW_WQKV = 0                    # [0, 3H)  : (3H, D, D_KV) head-major fused QKV
ROW_WO = 3 * N_HEADS            # [3H, 4H) : (H, D_KV, D)  head-major output proj
ROW_BIAS = 4 * N_HEADS          # [4H, 5H) : (H, BS, BS)   block-diagonal bias
SLAB_G = 5 * N_HEADS
SLAB_R = max(D_MODEL, BS)       # 32 (sublane dim, 8-aligned)
SLAB_C = max(D_MODEL, BS, D_KV) # 32 (lane dim)


# ----------------------- relative position bias (glue) ---------------------
def _relative_position_bucket(relative_position, bidirectional=True,
                              num_buckets=32, max_distance=128):
    relative_buckets = jnp.zeros_like(relative_position)
    if bidirectional:
        num_buckets //= 2
        relative_buckets = relative_buckets + (relative_position > 0).astype(jnp.int32) * num_buckets
        relative_position = jnp.abs(relative_position)
    else:
        relative_position = -jnp.minimum(relative_position, jnp.zeros_like(relative_position))
    max_exact = num_buckets // 2
    is_small = relative_position < max_exact
    # NOTE: log(0) -> -inf cast to int32 happens here (same as HF reference);
    # it is always masked away by the jnp.where below.
    rel_if_large = max_exact + (
        jnp.log(relative_position.astype(jnp.float32) / max_exact)
        / math.log(max_distance / max_exact)
        * (num_buckets - max_exact)
    ).astype(jnp.int32)
    rel_if_large = jnp.minimum(rel_if_large, num_buckets - 1)
    relative_buckets = relative_buckets + jnp.where(is_small, relative_position, rel_if_large)
    return relative_buckets


def compute_bias_1d(rel_bias_weight, q_len, k_len):
    context = jnp.arange(q_len, dtype=jnp.int32)[:, None]
    memory = jnp.arange(k_len, dtype=jnp.int32)[None, :]
    rel_pos = memory - context
    buckets = _relative_position_bucket(rel_pos, bidirectional=True,
                                        num_buckets=NUM_BUCKETS,
                                        max_distance=MAX_DISTANCE)
    values = jnp.take(rel_bias_weight, buckets, axis=0)        # (q, k, H)
    return jnp.transpose(values, (2, 0, 1))[None]               # (1, H, q, k)


def compute_vertical_horizontal_bias(h_weight, v_weight, distances):
    h_dist, v_dist = distances                                   # each (1, S, S) int32
    h_bucket = _relative_position_bucket(h_dist, bidirectional=True,
                                         num_buckets=NUM_BUCKETS, max_distance=1000)
    v_bucket = _relative_position_bucket(v_dist, bidirectional=True,
                                         num_buckets=NUM_BUCKETS, max_distance=1000)
    h_vals = jnp.take(h_weight, h_bucket, axis=0)                # (1, S, S, H)
    v_vals = jnp.take(v_weight, v_bucket, axis=0)
    return (jnp.transpose(h_vals, (0, 3, 1, 2)),
            jnp.transpose(v_vals, (0, 3, 1, 2)))                 # (1, H, S, S)


# --------------------------- parameter packing ------------------------------
def prepare_t5_attention_params(ln_w, wq_t, wk_t, wv_t, wo_t, position_bias, batch):
    """One-time parameter prep (keep OUTSIDE the per-call path).

    * folds the T5 RMS-norm scale into W_q/W_k/W_v (exact: it only feeds them),
    * re-lays weights out head-major so the kernel needs no head relayouts,
    * replicates the (1, H, S, S) position bias into a block-diagonal
      (H, B*S, B*S) bias with cross-batch entries masked to -1e9,
    * packs everything into a single f32 slab -> one parameter DMA per call.
    """
    scale = ln_w.reshape(D_MODEL, 1).astype(jnp.float32)

    def head_major(w):                  # (D, H*D_KV) -> (H, D, D_KV)
        return jnp.transpose(w.reshape(D_MODEL, N_HEADS, D_KV), (1, 0, 2))

    wqkv_h = jnp.concatenate(
        [head_major(scale * wq_t), head_major(scale * wk_t), head_major(scale * wv_t)],
        axis=0)                                                   # (3H, D, D_KV)
    wo_h = wo_t.reshape(N_HEADS, D_KV, D_MODEL)                   # (H, D_KV, D)

    bs = batch * SEQ
    pb = position_bias[0].astype(jnp.float32)                     # (H, S, S)
    bias_full = jnp.full((N_HEADS, bs, bs), NEG_INF, jnp.float32)
    for b in range(batch):
        bias_full = bias_full.at[:, b * SEQ:(b + 1) * SEQ,
                                 b * SEQ:(b + 1) * SEQ].set(pb)

    slab = jnp.zeros((SLAB_G, SLAB_R, SLAB_C), jnp.float32)
    slab = slab.at[ROW_WQKV:ROW_WO, 0:D_MODEL, 0:D_KV].set(wqkv_h)
    slab = slab.at[ROW_WO:ROW_BIAS, 0:D_KV, 0:D_MODEL].set(wo_h)
    slab = slab.at[ROW_BIAS:SLAB_G, 0:bs, 0:bs].set(bias_full)
    return slab


# ------------------------------ Pallas kernel ------------------------------
def t5_self_attn_kernel(x_ref, p_ref, o_ref):
    # x_ref: (BS, D) f32 — whole batch, single invocation (no grid).
    x = x_ref[...]

    # T5 RMS layer norm (no mean subtraction / no bias); the learned scale is
    # folded into the QKV weights at prep time, so only rsqrt(var) remains here.
    var = jnp.mean(x * x, axis=-1, keepdims=True)
    normed = (x * jax.lax.rsqrt(var + EPS)).astype(jnp.bfloat16)

    # Unpack the parameter slab with static, tile-aligned ref slices.
    wqkv = p_ref[ROW_WQKV:ROW_WO, 0:D_MODEL, 0:D_KV].astype(jnp.bfloat16)   # (3H, D, D_KV)
    wo = p_ref[ROW_WO:ROW_BIAS, 0:D_KV, 0:D_MODEL].astype(jnp.bfloat16)     # (H, D_KV, D)
    bias = p_ref[ROW_BIAS:SLAB_G, 0:BS, 0:BS]                               # (H, BS, BS) f32

    # Fused Q/K/V projection as ONE leading-batch (3H) einsum: heads never live
    # in the lane dim, so no per-head lane slicing / concatenation is needed.
    nb = jnp.broadcast_to(normed[None], (3 * N_HEADS, BS, D_MODEL))
    qkv = jnp.einsum('gnd,gde->gne', nb, wqkv,
                     preferred_element_type=jnp.float32)                     # (3H, BS, D_KV)
    q = qkv[0:N_HEADS].astype(jnp.bfloat16)                                  # (H, BS, D_KV)
    k = qkv[N_HEADS:2 * N_HEADS].astype(jnp.bfloat16)
    v = qkv[2 * N_HEADS:3 * N_HEADS].astype(jnp.bfloat16)

    # Attention over all BS = B*S tokens at once; the precomputed block-diagonal
    # bias carries both the T5 relative-position bias (same-batch blocks) and a
    # -1e9 mask for cross-batch pairs, so per-batch attention is preserved.
    # (T5: no 1/sqrt(d_kv) scaling.)
    scores = jnp.einsum('gnd,gmd->gnm', q, k,
                        preferred_element_type=jnp.float32)                  # (H, BS, BS)
    scores = scores + bias

    m = jnp.max(scores, axis=-1, keepdims=True)
    e = jnp.exp(scores - m)
    attn = e / jnp.sum(e, axis=-1, keepdims=True)        # exact softmax in f32

    ctx = jnp.einsum('gnm,gmd->gnd', attn.astype(jnp.bfloat16), v,
                     preferred_element_type=jnp.float32)                     # (H, BS, D_KV)

    # Per-head output projection, then merge heads with a leading-dim sum
    # (plain vreg adds — no lane-dim concatenate / relayout).
    out_h = jnp.einsum('gnd,gde->gne', ctx.astype(jnp.bfloat16), wo,
                       preferred_element_type=jnp.float32)                   # (H, BS, D)
    attn_out = jnp.sum(out_h, axis=0)                                        # (BS, D)

    o_ref[...] = (x + attn_out).astype(o_ref.dtype)


def t5_layer_self_attention(hidden_states, params_slab, position_bias):
    """Returns (hidden, present_key_value=None, position_bias) like the module."""
    B, S, D = hidden_states.shape
    x2d = hidden_states.reshape(B * S, D)              # free layout change outside

    out2d = pl.pallas_call(
        t5_self_attn_kernel,
        out_shape=jax.ShapeDtypeStruct((B * S, D), hidden_states.dtype),
        in_specs=[pl.BlockSpec(memory_space=pltpu.MemorySpace.VMEM),
                  pl.BlockSpec(memory_space=pltpu.MemorySpace.VMEM)],
        out_specs=pl.BlockSpec(memory_space=pltpu.MemorySpace.VMEM),
    )(x2d, params_slab)

    return out2d.reshape(B, S, D), None, position_bias


# ------------------------------ reference ----------------------------------
def reference(hidden, ln_w, wq_t, wk_t, wv_t, wo_t, position_bias):
    B, S, D = hidden.shape
    x = hidden.astype(jnp.float32)
    var = jnp.mean(x * x, axis=-1, keepdims=True)
    normed = x * jax.lax.rsqrt(var + EPS) * ln_w
    q = normed @ wq_t
    k = normed @ wk_t
    v = normed @ wv_t

    def split(t):
        return t.reshape(B, S, N_HEADS, D_KV).transpose(0, 2, 1, 3)

    qh, kh, vh = split(q), split(k), split(v)
    scores = jnp.einsum('bhqd,bhkd->bhqk', qh, kh) + position_bias
    attn = jax.nn.softmax(scores, axis=-1)
    ctx = jnp.einsum('bhqk,bhkd->bhqd', attn, vh).transpose(0, 2, 1, 3).reshape(B, S, INNER)
    return hidden + ctx @ wo_t


# --------------------------------- main -------------------------------------
if __name__ == "__main__":
    key = jax.random.PRNGKey(0)
    keys = jax.random.split(key, 9)

    # deterministic parameter init (shapes from T5Attention / T5LayerNorm __init__)
    ln_w = jnp.ones((1, D_MODEL), dtype=jnp.float32)                           # T5LayerNorm.weight
    wq_t = 0.05 * jax.random.normal(keys[0], (D_MODEL, INNER), jnp.float32)    # q.weight^T
    wk_t = 0.05 * jax.random.normal(keys[1], (D_MODEL, INNER), jnp.float32)    # k.weight^T
    wv_t = 0.05 * jax.random.normal(keys[2], (D_MODEL, INNER), jnp.float32)    # v.weight^T
    wo_t = 0.05 * jax.random.normal(keys[3], (INNER, D_MODEL), jnp.float32)    # o.weight^T
    rel_bias_w = 0.05 * jax.random.normal(keys[4], (NUM_BUCKETS, N_HEADS), jnp.float32)
    rel_h_w = 0.05 * jax.random.normal(keys[5], (NUM_BUCKETS, N_HEADS), jnp.float32)
    rel_v_w = 0.05 * jax.random.normal(keys[6], (NUM_BUCKETS, N_HEADS), jnp.float32)

    # inputs
    hidden_states = jax.random.normal(keys[7], (BATCH, SEQ, D_MODEL), jnp.float32)

    # synthetic box coordinates -> horizontal/vertical distances, shape (1, S, S)
    grid_w = 4
    xs = jnp.arange(SEQ, dtype=jnp.int32) % grid_w
    ys = jnp.arange(SEQ, dtype=jnp.int32) // grid_w
    h_dist = (xs[:, None] - xs[None, :])[None]
    v_dist = (ys[:, None] - ys[None, :])[None]

    # position bias (has_relative_attention_bias=True path), computed in plain JAX
    bias_1d = compute_bias_1d(rel_bias_w, SEQ, SEQ)                            # (1, H, S, S)
    h_vals, v_vals = compute_vertical_horizontal_bias(rel_h_w, rel_v_w, (h_dist, v_dist))
    position_bias = bias_1d + h_vals + v_vals                                  # (1, H, S, S)

    # one-time parameter packing (fold LN scale, head-major weights, packed bias)
    params_slab = prepare_t5_attention_params(
        ln_w, wq_t, wk_t, wv_t, wo_t, position_bias, BATCH)

    out, present_kv, pb = t5_layer_self_attention(hidden_states, params_slab, position_bias)
    out = jax.block_until_ready(out)

    ref = reference(hidden_states, ln_w, wq_t, wk_t, wv_t, wo_t, position_bias)
    assert out.shape == (BATCH, SEQ, D_MODEL)
    # tolerance accounts for bf16 MXU operands (f32 accumulation); observed error ~1e-3
    err = float(jnp.max(jnp.abs(out - ref)))
    assert jnp.allclose(out, ref, atol=2e-2, rtol=2e-2), err

    print("KERNEL_OK")
</pallas_src>

<mosaic_0001>
module attributes {stable_mosaic.version = 11 : i64} {
  func.func @t5_self_attn_kernel(%arg0: memref<16x32xf32, #tpu.memory_space<vmem>>, %arg1: memref<20x32x32xf32, #tpu.memory_space<vmem>>, %arg2: memref<16x32xf32, #tpu.memory_space<vmem>>) attributes {dimension_semantics = [], scalar_prefetch = 0 : i64, scratch_operands = 0 : i64, tpu.core_type = #tpu.core_type<tc>} {
    %c0 = arith.constant 0 : index
    %c0_0 = arith.constant 0 : index
    %0 = vector.load %arg0[%c0, %c0_0] : memref<16x32xf32, #tpu.memory_space<vmem>>, vector<16x32xf32>
    %1 = arith.mulf %0, %0 : vector<16x32xf32>
    %cst = arith.constant dense<0.000000e+00> : vector<16xf32>
    %2 = vector.multi_reduction <add>, %1, %cst [1] : vector<16x32xf32> to vector<16xf32>
    %3 = vector.shape_cast %2 : vector<16xf32> to vector<16x1xf32>
    %cst_1 = arith.constant 3.200000e+01 : f32
    %4 = vector.broadcast %cst_1 : f32 to vector<16x1xf32>
    %5 = arith.divf %3, %4 : vector<16x1xf32>
    %cst_2 = arith.constant 9.99999997E-7 : f32
    %6 = vector.broadcast %cst_2 : f32 to vector<16x1xf32>
    %7 = arith.addf %5, %6 : vector<16x1xf32>
    %8 = math.rsqrt %7 : vector<16x1xf32>
    %9 = vector.broadcast %8 : vector<16x1xf32> to vector<16x32xf32>
    %10 = arith.mulf %0, %9 : vector<16x32xf32>
    %11 = arith.truncf %10 : vector<16x32xf32> to vector<16x32xbf16>
    %c0_3 = arith.constant 0 : index
    %c0_4 = arith.constant 0 : index
    %c0_5 = arith.constant 0 : index
    %12 = vector.load %arg1[%c0_3, %c0_4, %c0_5] : memref<20x32x32xf32, #tpu.memory_space<vmem>>, vector<12x32x8xf32>
    %13 = arith.truncf %12 : vector<12x32x8xf32> to vector<12x32x8xbf16>
    %c12 = arith.constant 12 : index
    %c0_6 = arith.constant 0 : index
    %c0_7 = arith.constant 0 : index
    %14 = vector.load %arg1[%c12, %c0_6, %c0_7] : memref<20x32x32xf32, #tpu.memory_space<vmem>>, vector<4x8x32xf32>
    %15 = arith.truncf %14 : vector<4x8x32xf32> to vector<4x8x32xbf16>
    %c16 = arith.constant 16 : index
    %c0_8 = arith.constant 0 : index
    %c0_9 = arith.constant 0 : index
    %16 = vector.load %arg1[%c16, %c0_8, %c0_9] : memref<20x32x32xf32, #tpu.memory_space<vmem>>, vector<4x16x16xf32>
    %17 = vector.shape_cast %11 : vector<16x32xbf16> to vector<1x16x32xbf16>
    %18 = vector.shape_cast %17 : vector<1x16x32xbf16> to vector<1x16x32xbf16>
    %19 = vector.broadcast %18 : vector<1x16x32xbf16> to vector<12x16x32xbf16>
    "tpu.trace_start"() <{level = 10 : i32, message = "gnd,gde->gne"}> : () -> ()
    %cst_10 = arith.constant dense<0.000000e+00> : vector<12x16x8xf32>
    %20 = tpu.matmul %19, %13, %cst_10 {dimension_numbers = #tpu.dot_dimension_numbers<[2], [1], [1], [2], [0, 0, 0, 1, 1, 2], [0], [0]>} : vector<12x16x32xbf16>, vector<12x32x8xbf16>, vector<12x16x8xf32> -> vector<12x16x8xf32>
    "tpu.trace_stop"() : () -> ()
    %21 = vector.extract_strided_slice %20 {offsets = [0, 0, 0], sizes = [4, 16, 8], strides = [1, 1, 1]} : vector<12x16x8xf32> to vector<4x16x8xf32>
    %22 = arith.truncf %21 : vector<4x16x8xf32> to vector<4x16x8xbf16>
    %23 = vector.extract_strided_slice %20 {offsets = [4, 0, 0], sizes = [4, 16, 8], strides = [1, 1, 1]} : vector<12x16x8xf32> to vector<4x16x8xf32>
    %24 = arith.truncf %23 : vector<4x16x8xf32> to vector<4x16x8xbf16>
    %25 = vector.extract_strided_slice %20 {offsets = [8, 0, 0], sizes = [4, 16, 8], strides = [1, 1, 1]} : vector<12x16x8xf32> to vector<4x16x8xf32>
    %26 = arith.truncf %25 : vector<4x16x8xf32> to vector<4x16x8xbf16>
    "tpu.trace_start"() <{level = 10 : i32, message = "gnd,gmd->gnm"}> : () -> ()
    %cst_11 = arith.constant dense<0.000000e+00> : vector<4x16x16xf32>
    %27 = tpu.matmul %22, %24, %cst_11 {dimension_numbers = #tpu.dot_dimension_numbers<[2], [2], [1], [1], [0, 0, 0, 1, 1, 1], [0], [0]>} : vector<4x16x8xbf16>, vector<4x16x8xbf16>, vector<4x16x16xf32> -> vector<4x16x16xf32>
    "tpu.trace_stop"() : () -> ()
    %28 = arith.addf %27, %16 : vector<4x16x16xf32>
    %cst_12 = arith.constant dense<0xFF800000> : vector<4x16xf32>
    %29 = vector.multi_reduction <maximumf>, %28, %cst_12 [2] : vector<4x16x16xf32> to vector<4x16xf32>
    %30 = vector.shape_cast %29 : vector<4x16xf32> to vector<4x16x1xf32>
    %31 = vector.broadcast %30 : vector<4x16x1xf32> to vector<4x16x16xf32>
    %32 = arith.subf %28, %31 : vector<4x16x16xf32>
    %33 = math.exp %32 : vector<4x16x16xf32>
    %cst_13 = arith.constant dense<0.000000e+00> : vector<4x16xf32>
    %34 = vector.multi_reduction <add>, %33, %cst_13 [2] : vector<4x16x16xf32> to vector<4x16xf32>
    %35 = vector.shape_cast %34 : vector<4x16xf32> to vector<4x16x1xf32>
    %36 = vector.broadcast %35 : vector<4x16x1xf32> to vector<4x16x16xf32>
    %37 = arith.divf %33, %36 : vector<4x16x16xf32>
    %38 = arith.truncf %37 : vector<4x16x16xf32> to vector<4x16x16xbf16>
    "tpu.trace_start"() <{level = 10 : i32, message = "gnm,gmd->gnd"}> : () -> ()
    %cst_14 = arith.constant dense<0.000000e+00> : vector<4x16x8xf32>
    %39 = tpu.matmul %38, %26, %cst_14 {dimension_numbers = #tpu.dot_dimension_numbers<[2], [1], [1], [2], [0, 0, 0, 1, 1, 2], [0], [0]>} : vector<4x16x16xbf16>, vector<4x16x8xbf16>, vector<4x16x8xf32> -> vector<4x16x8xf32>
    "tpu.trace_stop"() : () -> ()
    %40 = arith.truncf %39 : vector<4x16x8xf32> to vector<4x16x8xbf16>
    "tpu.trace_start"() <{level = 10 : i32, message = "gnd,gde->gne"}> : () -> ()
    %cst_15 = arith.constant dense<0.000000e+00> : vector<4x16x32xf32>
    %41 = tpu.matmul %40, %15, %cst_15 {dimension_numbers = #tpu.dot_dimension_numbers<[2], [1], [1], [2], [0, 0, 0, 1, 1, 2], [0], [0]>} : vector<4x16x8xbf16>, vector<4x8x32xbf16>, vector<4x16x32xf32> -> vector<4x16x32xf32>
    "tpu.trace_stop"() : () -> ()
    %cst_16 = arith.constant dense<0.000000e+00> : vector<16x32xf32>
    %42 = vector.multi_reduction <add>, %41, %cst_16 [0] : vector<4x16x32xf32> to vector<16x32xf32>
    %43 = arith.addf %0, %42 : vector<16x32xf32>
    %c0_17 = arith.constant 0 : index
    %c0_18 = arith.constant 0 : index
    %44 = vector.load %arg2[%c0_17, %c0_18] : memref<16x32xf32, #tpu.memory_space<vmem>>, vector<16x32xf32>
    tpu.vector_store %arg2[%c0_17, %c0_18], %43 {strides = array<i32>} : memref<16x32xf32, #tpu.memory_space<vmem>>, vector<16x32xf32>,
    return
  }
}

</mosaic_0001>

<llo_original>
// kernel: tpu_custom_call.1
$region0: #{tpu_custom_call.1}
  #allocation0 [shape = 'u32[]', space=smem, size = 0x4, offset = 0x4, fixed_abs, tag = 'smem constant byte address 0x4 - core index']
  #allocation1 [shape = 'u32[72,128]{1,0:T(1,128)}', space=vmem, size = 0x9000, scoped, tag = 'internal scratch']
  %s0 = inlined_call_operand.hbm [shape: f32[16,32], index: 0, kind: input, shape index: {}]
  %s1 = inlined_call_operand.hbm [shape: f32[20,32,32], index: 1, kind: input, shape index: {}]
  %s2 = inlined_call_operand.hbm [shape: f32[16,32], index: 2, kind: output, shape index: {}]
  %s3 = sld [smem:[#allocation0]]
  $region26: #{tpu_custom_call.1} parent=0
    _
  %s5 = ssub.s32 1, %s3
  %s6 = scalar_select 0, %s5, %s3
  $region1: #{tpu_custom_call.1} parent=0
    #allocation2 [shape = 'u8[8192]{0}', space=vmem, size = 0x2000, scoped, tag = 'input window, operand 0, single buffered']
    #allocation3 [shape = 's32[1]{0}', space=sflag, size = 0x4, scoped, tag = 'scoped memory for tpu_custom_call.1']
    #allocation4 [shape = 's32[1]{0}', space=sflag, size = 0x4, scoped, tag = 'scoped memory for tpu_custom_call.1']
    #allocation5 [shape = 'u8[327680]{0}', space=vmem, size = 0x50000, scoped, tag = 'input window, operand 1, single buffered']
    #allocation6 [shape = 's32[1]{0}', space=sflag, size = 0x4, scoped, tag = 'scoped memory for tpu_custom_call.1']
    #allocation7 [shape = 'u8[8192]{0}', space=vmem, size = 0x2000, scoped, tag = 'output window, operand 0, single buffered']
    %7 = vsyncpa [#allocation3], 0
    %8 = vsyncpa [#allocation6], 0
    %9 = vsyncpa [#allocation4], 0
    // Predicated region
    $region2: #{tpu_custom_call.1} parent=1 // pred_check
      _
    $region3: #{tpu_custom_call.1} parent=1 // pred_check_branch
      %11 = sbr.rel (0) target = $region5
    $region4: #{tpu_custom_call.1} parent=1 // pred_region
      %13 = vsyncadd [#allocation3], 0
      %s14 = sshll.u32 %s0, 4
      %s15 = int_to_ptr.hbm [resolvable:$true] %s14
      %s16 = sshll.u32 [#allocation2], 4
      %s17 = int_to_ptr.vmem [resolvable:$true] %s16
      %22 = dma.hbm_to_vmem [thread:$0]  %s15, 256, %s17, [#allocation3], 128, 128, 8
    $region5: #{tpu_custom_call.1} parent=1 // pred_fallthru
      _
    // Predicated region
    $region6: #{tpu_custom_call.1} parent=1 // pred_check
      _
    $region7: #{tpu_custom_call.1} parent=1 // pred_check_branch
      %24 = sbr.rel (0) target = $region9
    $region8: #{tpu_custom_call.1} parent=1 // pred_region
      %26 = vsyncadd [#allocation6], 0
      %s27 = sshll.u32 %s1, 4
      %s28 = int_to_ptr.hbm [resolvable:$true] %s27
      %s29 = sshll.u32 [#allocation5], 4
      %s30 = int_to_ptr.vmem [resolvable:$true] %s29
      %35 = dma.hbm_to_vmem [thread:$0]  %s28, 10240, %s30, [#allocation6], 128, 128, 8
    $region9: #{tpu_custom_call.1} parent=1 // pred_fallthru
      _
    // Predicated region
    $region10: #{tpu_custom_call.1} parent=1 // pred_check
      _
    $region11: #{tpu_custom_call.1} parent=1 // pred_check_branch
      %37 = sbr.rel (0) target = $region13
    $region12: #{tpu_custom_call.1} parent=1 // pred_region
      %39 = dma.done [#allocation3], 256
    $region13: #{tpu_custom_call.1} parent=1 // pred_fallthru
      _
    // Predicated region
    $region14: #{tpu_custom_call.1} parent=1 // pred_check
      _
    $region15: #{tpu_custom_call.1} parent=1 // pred_check_branch
      %41 = sbr.rel (0) target = $region17
    $region16: #{tpu_custom_call.1} parent=1 // pred_region
      %43 = dma.done [#allocation6], 10240
    $region17: #{tpu_custom_call.1} parent=1 // pred_fallthru
      _
    %v45 = vld [vmem:[#allocation2] sm:$0xff]
    %v46 = vld [vmem:[#allocation2 + $0x8] sm:$0xff]
    %v47 = vmul.f32 %v45, %v45
    %v48 = vmul.f32 %v46, %v46
    %vm49 = vcmask 261120
    %v50 = vsel %vm49, %v47, 0.0
    %51 = vadd.xlane.f32.xlu0 %v50
    %v52 = vpop.xlane.xlu0 %51
    %v53 = vsel %vm49, %v48, 0.0
    %54 = vadd.xlane.f32.xlu0 %v53
    %v55 = vpop.xlane.xlu0 %54
    %v56 = vrcp.pop 32.0
    %v57 = vmul.f32 32.0, %v56
    %v58 = vsub.f32 1.0, %v57
    %v59 = vmul.f32 %v56, %v58
    %v60 = vadd.f32 %v56, %v59
    %vm61 = vweird.f32 %v56
    %v62 = vsel %vm61, %v56, %v60
    %v63 = vmul.f32 %v52, %v62
    %v64 = vmul.f32 %v55, %v62
    %v65 = vadd.f32 %v63, 1e-06
    %v66 = vadd.f32 %v64, 1e-06
    %v67 = vrsqrt.pop %v65
    %v68 = vmul.f32 %v67, %v65
    %v69 = vmul.f32 %v68, %v67
    %v70 = vmul.f32 0.5, %v69
    %v71 = vsub.f32 1.5, %v70
    %v72 = vmul.f32 %v67, %v71
    %vm73 = vweird.f32 %v65
    %vm74 = vweird.f32 %v67
    %vm75 = vmor %vm73, %vm74
    %v76 = vsel %vm75, %v67, %v72
    %v77 = vrsqrt.pop %v66
    %v78 = vmul.f32 %v77, %v66
    %v79 = vmul.f32 %v78, %v77
    %v80 = vmul.f32 0.5, %v79
    %v81 = vsub.f32 1.5, %v80
    %v82 = vmul.f32 %v77, %v81
    %vm83 = vweird.f32 %v66
    %vm84 = vweird.f32 %v77
    %vm85 = vmor %vm83, %vm84
    %v86 = vsel %vm85, %v77, %v82
    %v87 = vmul.f32 %v45, %v76
    %v88 = vmul.f32 %v46, %v86
    %v89 = vpack.c.bf16 %v87, %v87
    %v90 = vpack.c.bf16 %v88, %v88
    %v91 = vld [vmem:[#allocation5] sm:$0xff]
    %v92 = vld [vmem:[#allocation5 + $0x8] sm:$0xff]
    %v93 = vld [vmem:[#allocation5 + $0x10] sm:$0xff]
    %v94 = vld [vmem:[#allocation5 + $0x18] sm:$0xff]
    %v95 = vld [vmem:[#allocation5 + $0x20] sm:$0xff]
    %v96 = vld [vmem:[#allocation5 + $0x28] sm:$0xff]
    %v97 = vld [vmem:[#allocation5 + $0x30] sm:$0xff]
    %v98 = vld [vmem:[#allocation5 + $0x38] sm:$0xff]
    %v99 = vld [vmem:[#allocation5 + $0x40] sm:$0xff]
    %v100 = vld [vmem:[#allocation5 + $0x48] sm:$0xff]
    %v101 = vld [vmem:[#allocation5 + $0x50] sm:$0xff]
    %v102 = vld [vmem:[#allocation5 + $0x58] sm:$0xff]
    %v103 = vld [vmem:[#allocation5 + $0x60] sm:$0xff]
    %v104 = vld [vmem:[#allocation5 + $0x68] sm:$0xff]
    %v105 = vld [vmem:[#allocation5 + $0x70] sm:$0xff]
    %v106 = vld [vmem:[#allocation5 + $0x78] sm:$0xff]
    %v107 = vld [vmem:[#allocation5 + $0x80] sm:$0xff]
    %v108 = vld [vmem:[#allocation5 + $0x88] sm:$0xff]
    %v109 = vld [vmem:[#allocation5 + $0x90] sm:$0xff]
    %v110 = vld [vmem:[#allocation5 + $0x98] sm:$0xff]
    %v111 = vld [vmem:[#allocation5 + $0xa0] sm:$0xff]
    %v112 = vld [vmem:[#allocation5 + $0xa8] sm:$0xff]
    %v113 = vld [vmem:[#allocation5 + $0xb0] sm:$0xff]
    %v114 = vld [vmem:[#allocation5 + $0xb8] sm:$0xff]
    %v115 = vld [vmem:[#allocation5 + $0xc0] sm:$0xff]
    %v116 = vld [vmem:[#allocation5 + $0xc8] sm:$0xff]
    %v117 = vld [vmem:[#allocation5 + $0xd0] sm:$0xff]
    %v118 = vld [vmem:[#allocation5 + $0xd8] sm:$0xff]
    %v119 = vld [vmem:[#allocation5 + $0xe0] sm:$0xff]
    %v120 = vld [vmem:[#allocation5 + $0xe8] sm:$0xff]
    %v121 = vld [vmem:[#allocation5 + $0xf0] sm:$0xff]
    %v122 = vld [vmem:[#allocation5 + $0xf8] sm:$0xff]
    %v123 = vld [vmem:[#allocation5 + $0x100] sm:$0xff]
    %v124 = vld [vmem:[#allocation5 + $0x108] sm:$0xff]
    %v125 = vld [vmem:[#allocation5 + $0x110] sm:$0xff]
    %v126 = vld [vmem:[#allocation5 + $0x118] sm:$0xff]
    %v127 = vld [vmem:[#allocation5 + $0x120] sm:$0xff]
    %v128 = vld [vmem:[#allocation5 + $0x128] sm:$0xff]
    %v129 = vld [vmem:[#allocation5 + $0x130] sm:$0xff]
    %v130 = vld [vmem:[#allocation5 + $0x138] sm:$0xff]
    %v131 = vld [vmem:[#allocation5 + $0x140] sm:$0xff]
    %v132 = vld [vmem:[#allocation5 + $0x148] sm:$0xff]
    %v133 = vld [vmem:[#allocation5 + $0x150] sm:$0xff]
    %v134 = vld [vmem:[#allocation5 + $0x158] sm:$0xff]
    %v135 = vld [vmem:[#allocation5 + $0x160] sm:$0xff]
    %v136 = vld [vmem:[#allocation5 + $0x168] sm:$0xff]
    %v137 = vld [vmem:[#allocation5 + $0x170] sm:$0xff]
    %v138 = vld [vmem:[#allocation5 + $0x178] sm:$0xff]
    %v139 = vpack.c.bf16 %v91, %v91
    %v140 = vpack.c.bf16 %v92, %v92
    %v141 = vpack.c.bf16 %v93, %v93
    %v142 = vpack.c.bf16 %v94, %v94
    %v143 = vpack.c.bf16 %v95, %v95
    %v144 = vpack.c.bf16 %v96, %v96
    %v145 = vpack.c.bf16 %v97, %v97
    %v146 = vpack.c.bf16 %v98, %v98
    %v147 = vpack.c.bf16 %v99, %v99
    %v148 = vpack.c.bf16 %v100, %v100
    %v149 = vpack.c.bf16 %v101, %v101
    %v150 = vpack.c.bf16 %v102, %v102
    %v151 = vpack.c.bf16 %v103, %v103
    %v152 = vpack.c.bf16 %v104, %v104
    %v153 = vpack.c.bf16 %v105, %v105
    %v154 = vpack.c.bf16 %v106, %v106
    %v155 = vpack.c.bf16 %v107, %v107
    %v156 = vpack.c.bf16 %v108, %v108
    %v157 = vpack.c.bf16 %v109, %v109
    %v158 = vpack.c.bf16 %v110, %v110
    %v159 = vpack.c.bf16 %v111, %v111
    %v160 = vpack.c.bf16 %v112, %v112
    %v161 = vpack.c.bf16 %v113, %v113
    %v162 = vpack.c.bf16 %v114, %v114
    %v163 = vpack.c.bf16 %v115, %v115
    %v164 = vpack.c.bf16 %v116, %v116
    %v165 = vpack.c.bf16 %v117, %v117
    %v166 = vpack.c.bf16 %v118, %v118
    %v167 = vpack.c.bf16 %v119, %v119
    %v168 = vpack.c.bf16 %v120, %v120
    %v169 = vpack.c.bf16 %v121, %v121
    %v170 = vpack.c.bf16 %v122, %v122
    %v171 = vpack.c.bf16 %v123, %v123
    %v172 = vpack.c.bf16 %v124, %v124
    %v173 = vpack.c.bf16 %v125, %v125
    %v174 = vpack.c.bf16 %v126, %v126
    %v175 = vpack.c.bf16 %v127, %v127
    %v176 = vpack.c.bf16 %v128, %v128
    %v177 = vpack.c.bf16 %v129, %v129
    %v178 = vpack.c.bf16 %v130, %v130
    %v179 = vpack.c.bf16 %v131, %v131
    %v180 = vpack.c.bf16 %v132, %v132
    %v181 = vpack.c.bf16 %v133, %v133
    %v182 = vpack.c.bf16 %v134, %v134
    %v183 = vpack.c.bf16 %v135, %v135
    %v184 = vpack.c.bf16 %v136, %v136
    %v185 = vpack.c.bf16 %v137, %v137
    %v186 = vpack.c.bf16 %v138, %v138
    %s187 = scalar_lea.vmem [#allocation5], 384
    %v188 = vld [vmem:[%s187] sm:$0xff]
    %v189 = vld [vmem:[%s187 + $0x20] sm:$0xff]
    %v190 = vld [vmem:[%s187 + $0x40] sm:$0xff]
    %v191 = vld [vmem:[%s187 + $0x60] sm:$0xff]
    %v192 = vpack.c.bf16 %v188, %v188
    %v193 = vpack.c.bf16 %v189, %v189
    %v194 = vpack.c.bf16 %v190, %v190
    %v195 = vpack.c.bf16 %v191, %v191
    %s196 = scalar_lea.vmem [#allocation5], 512
    %v197 = vld [vmem:[%s196] sm:$0xff]
    %v198 = vld [vmem:[%s196 + $0x8] sm:$0xff]
    %v199 = vld [vmem:[%s196 + $0x20] sm:$0xff]
    %v200 = vld [vmem:[%s196 + $0x28] sm:$0xff]
    %v201 = vld [vmem:[%s196 + $0x40] sm:$0xff]
    %v202 = vld [vmem:[%s196 + $0x48] sm:$0xff]
    %v203 = vld [vmem:[%s196 + $0x60] sm:$0xff]
    %v204 = vld [vmem:[%s196 + $0x68] sm:$0xff]
    %v207 = vunpack.c.l.b16 %v89
    %v208 = vunpack.c.l.b16 %v90
    %v209 = vpack.c.b16 %v208, %v207
    %v214 = vunpack.c.l.b16 %v139
    %v215 = vunpack.c.l.b16 %v140
    %v216 = vunpack.c.l.b16 %v141
    %v217 = vunpack.c.l.b16 %v142
    %v218 = vpack.c.b16 %v215, %v214
    %v219 = vpack.c.b16 %v217, %v216
    %v223 = vsel %vm49, %v209, 0
    %225 = vmatpush.bf16.msra.mxu0 0
    %226 = vmatpush.bf16.msra.mxu0 0
    %227 = vmatpush.bf16.msra.mxu0 0
    %228 = vmatpush.bf16.msra.mxu0 0
    %229 = vmatpush.bf16.msra.mxu0 0
    %230 = vmatpush.bf16.msra.mxu0 0
    %231 = vmatpush.bf16.msra.mxu0 %v219
    %232 = vmatpush.bf16.msra.mxu0 %v218
    %233 = vmatmul.bf16.gmra.mxu0 %v223
    %v234 = vpop.f32.mrf.mxu0
    %v235 = vadd.f32 0.0, %v234
    %v236 = vpop.f32.mrf.mxu0
    %v237 = vadd.f32 0.0, %v236
    %238 = vdwg.mxu0
    %v243 = vunpack.c.l.b16 %v143
    %v244 = vunpack.c.l.b16 %v144
    %v245 = vunpack.c.l.b16 %v145
    %v246 = vunpack.c.l.b16 %v146
    %v247 = vpack.c.b16 %v244, %v243
    %v248 = vpack.c.b16 %v246, %v245
    %251 = vmatpush.bf16.msra.mxu0 0
    %252 = vmatpush.bf16.msra.mxu0 0
    %253 = vmatpush.bf16.msra.mxu0 0
    %254 = vmatpush.bf16.msra.mxu0 0
    %255 = vmatpush.bf16.msra.mxu0 0
    %256 = vmatpush.bf16.msra.mxu0 0
    %257 = vmatpush.bf16.msra.mxu0 %v248
    %258 = vmatpush.bf16.msra.mxu0 %v247
    %259 = vmatmul.bf16.gmra.mxu0 %v223
    %v260 = vpop.f32.mrf.mxu0
    %v261 = vadd.f32 0.0, %v260
    %v262 = vpop.f32.mrf.mxu0
    %v263 = vadd.f32 0.0, %v262
    %264 = vdwg.mxu0
    %v269 = vunpack.c.l.b16 %v147
    %v270 = vunpack.c.l.b16 %v148
    %v271 = vunpack.c.l.b16 %v149
    %v272 = vunpack.c.l.b16 %v150
    %v273 = vpack.c.b16 %v270, %v269
    %v274 = vpack.c.b16 %v272, %v271
    %277 = vmatpush.bf16.msra.mxu0 0
    %278 = vmatpush.bf16.msra.mxu0 0
    %279 = vmatpush.bf16.msra.mxu0 0
    %280 = vmatpush.bf16.msra.mxu0 0
    %281 = vmatpush.bf16.msra.mxu0 0
    %282 = vmatpush.bf16.msra.mxu0 0
    %283 = vmatpush.bf16.msra.mxu0 %v274
    %284 = vmatpush.bf16.msra.mxu0 %v273
    %285 = vmatmul.bf16.gmra.mxu0 %v223
    %v286 = vpop.f32.mrf.mxu0
    %v287 = vadd.f32 0.0, %v286
    %v288 = vpop.f32.mrf.mxu0
    %v289 = vadd.f32 0.0, %v288
    %290 = vdwg.mxu0
    %v295 = vunpack.c.l.b16 %v151
    %v296 = vunpack.c.l.b16 %v152
    %v297 = vunpack.c.l.b16 %v153
    %v298 = vunpack.c.l.b16 %v154
    %v299 = vpack.c.b16 %v296, %v295
    %v300 = vpack.c.b16 %v298, %v297
    %303 = vmatpush.bf16.msra.mxu0 0
    %304 = vmatpush.bf16.msra.mxu0 0
    %305 = vmatpush.bf16.msra.mxu0 0
    %306 = vmatpush.bf16.msra.mxu0 0
    %307 = vmatpush.bf16.msra.mxu0 0
    %308 = vmatpush.bf16.msra.mxu0 0
    %309 = vmatpush.bf16.msra.mxu0 %v300
    %310 = vmatpush.bf16.msra.mxu0 %v299
    %311 = vmatmul.bf16.gmra.mxu0 %v223
    %v312 = vpop.f32.mrf.mxu0
    %v313 = vadd.f32 0.0, %v312
    %v314 = vpop.f32.mrf.mxu0
    %v315 = vadd.f32 0.0, %v314
    %316 = vdwg.mxu0
    %v321 = vunpack.c.l.b16 %v155
    %v322 = vunpack.c.l.b16 %v156
    %v323 = vunpack.c.l.b16 %v157
    %v324 = vunpack.c.l.b16 %v158
    %v325 = vpack.c.b16 %v322, %v321
    %v326 = vpack.c.b16 %v324, %v323
    %329 = vmatpush.bf16.msra.mxu0 0
    %330 = vmatpush.bf16.msra.mxu0 0
    %331 = vmatpush.bf16.msra.mxu0 0
    %332 = vmatpush.bf16.msra.mxu0 0
    %333 = vmatpush.bf16.msra.mxu0 0
    %334 = vmatpush.bf16.msra.mxu0 0
    %335 = vmatpush.bf16.msra.mxu0 %v326
    %336 = vmatpush.bf16.msra.mxu0 %v325
    %337 = vmatmul.bf16.gmra.mxu0 %v223
    %v338 = vpop.f32.mrf.mxu0
    %v339 = vadd.f32 0.0, %v338
    %v340 = vpop.f32.mrf.mxu0
    %v341 = vadd.f32 0.0, %v340
    %342 = vdwg.mxu0
    %v347 = vunpack.c.l.b16 %v159
    %v348 = vunpack.c.l.b16 %v160
    %v349 = vunpack.c.l.b16 %v161
    %v350 = vunpack.c.l.b16 %v162
    %v351 = vpack.c.b16 %v348, %v347
    %v352 = vpack.c.b16 %v350, %v349
    %355 = vmatpush.bf16.msra.mxu0 0
    %356 = vmatpush.bf16.msra.mxu0 0
    %357 = vmatpush.bf16.msra.mxu0 0
    %358 = vmatpush.bf16.msra.mxu0 0
    %359 = vmatpush.bf16.msra.mxu0 0
    %360 = vmatpush.bf16.msra.mxu0 0
    %361 = vmatpush.bf16.msra.mxu0 %v352
    %362 = vmatpush.bf16.msra.mxu0 %v351
    %363 = vmatmul.bf16.gmra.mxu0 %v223
    %v364 = vpop.f32.mrf.mxu0
    %v365 = vadd.f32 0.0, %v364
    %v366 = vpop.f32.mrf.mxu0
    %v367 = vadd.f32 0.0, %v366
    %368 = vdwg.mxu0
    %v373 = vunpack.c.l.b16 %v163
    %v374 = vunpack.c.l.b16 %v164
    %v375 = vunpack.c.l.b16 %v165
    %v376 = vunpack.c.l.b16 %v166
    %v377 = vpack.c.b16 %v374, %v373
    %v378 = vpack.c.b16 %v376, %v375
    %381 = vmatpush.bf16.msra.mxu0 0
    %382 = vmatpush.bf16.msra.mxu0 0
    %383 = vmatpush.bf16.msra.mxu0 0
    %384 = vmatpush.bf16.msra.mxu0 0
    %385 = vmatpush.bf16.msra.mxu0 0
    %386 = vmatpush.bf16.msra.mxu0 0
    %387 = vmatpush.bf16.msra.mxu0 %v378
    %388 = vmatpush.bf16.msra.mxu0 %v377
    %389 = vmatmul.bf16.gmra.mxu0 %v223
    %v390 = vpop.f32.mrf.mxu0
    %v391 = vadd.f32 0.0, %v390
    %v392 = vpop.f32.mrf.mxu0
    %v393 = vadd.f32 0.0, %v392
    %394 = vdwg.mxu0
    %v399 = vunpack.c.l.b16 %v167
    %v400 = vunpack.c.l.b16 %v168
    %v401 = vunpack.c.l.b16 %v169
    %v402 = vunpack.c.l.b16 %v170
    %v403 = vpack.c.b16 %v400, %v399
    %v404 = vpack.c.b16 %v402, %v401
    %407 = vmatpush.bf16.msra.mxu0 0
    %408 = vmatpush.bf16.msra.mxu0 0
    %409 = vmatpush.bf16.msra.mxu0 0
    %410 = vmatpush.bf16.msra.mxu0 0
    %411 = vmatpush.bf16.msra.mxu0 0
    %412 = vmatpush.bf16.msra.mxu0 0
    %413 = vmatpush.bf16.msra.mxu0 %v404
    %414 = vmatpush.bf16.msra.mxu0 %v403
    %415 = vmatmul.bf16.gmra.mxu0 %v223
    %v416 = vpop.f32.mrf.mxu0
    %v417 = vadd.f32 0.0, %v416
    %v418 = vpop.f32.mrf.mxu0
    %v419 = vadd.f32 0.0, %v418
    %420 = vdwg.mxu0
    %v425 = vunpack.c.l.b16 %v171
    %v426 = vunpack.c.l.b16 %v172
    %v427 = vunpack.c.l.b16 %v173
    %v428 = vunpack.c.l.b16 %v174
    %v429 = vpack.c.b16 %v426, %v425
    %v430 = vpack.c.b16 %v428, %v427
    %433 = vmatpush.bf16.msra.mxu0 0
    %434 = vmatpush.bf16.msra.mxu0 0
    %435 = vmatpush.bf16.msra.mxu0 0
    %436 = vmatpush.bf16.msra.mxu0 0
    %437 = vmatpush.bf16.msra.mxu0 0
    %438 = vmatpush.bf16.msra.mxu0 0
    %439 = vmatpush.bf16.msra.mxu0 %v430
    %440 = vmatpush.bf16.msra.mxu0 %v429
    %441 = vmatmul.bf16.gmra.mxu0 %v223
    %v442 = vpop.f32.mrf.mxu0
    %v443 = vadd.f32 0.0, %v442
    %v444 = vpop.f32.mrf.mxu0
    %v445 = vadd.f32 0.0, %v444
    %446 = vdwg.mxu0
    %v451 = vunpack.c.l.b16 %v175
    %v452 = vunpack.c.l.b16 %v176
    %v453 = vunpack.c.l.b16 %v177
    %v454 = vunpack.c.l.b16 %v178
    %v455 = vpack.c.b16 %v452, %v451
    %v456 = vpack.c.b16 %v454, %v453
    %459 = vmatpush.bf16.msra.mxu0 0
    %460 = vmatpush.bf16.msra.mxu0 0
    %461 = vmatpush.bf16.msra.mxu0 0
    %462 = vmatpush.bf16.msra.mxu0 0
    %463 = vmatpush.bf16.msra.mxu0 0
    %464 = vmatpush.bf16.msra.mxu0 0
    %465 = vmatpush.bf16.msra.mxu0 %v456
    %466 = vmatpush.bf16.msra.mxu0 %v455
    %467 = vmatmul.bf16.gmra.mxu0 %v223
    %v468 = vpop.f32.mrf.mxu0
    %v469 = vadd.f32 0.0, %v468
    %v470 = vpop.f32.mrf.mxu0
    %v471 = vadd.f32 0.0, %v470
    %472 = vdwg.mxu0
    %v477 = vunpack.c.l.b16 %v179
    %v478 = vunpack.c.l.b16 %v180
    %v479 = vunpack.c.l.b16 %v181
    %v480 = vunpack.c.l.b16 %v182
    %v481 = vpack.c.b16 %v478, %v477
    %v482 = vpack.c.b16 %v480, %v479
    %485 = vmatpush.bf16.msra.mxu0 0
    %486 = vmatpush.bf16.msra.mxu0 0
    %487 = vmatpush.bf16.msra.mxu0 0
    %488 = vmatpush.bf16.msra.mxu0 0
    %489 = vmatpush.bf16.msra.mxu0 0
    %490 = vmatpush.bf16.msra.mxu0 0
    %491 = vmatpush.bf16.msra.mxu0 %v482
    %492 = vmatpush.bf16.msra.mxu0 %v481
    %493 = vmatmul.bf16.gmra.mxu0 %v223
    %v494 = vpop.f32.mrf.mxu0
    %v495 = vadd.f32 0.0, %v494
    %v496 = vpop.f32.mrf.mxu0
    %v497 = vadd.f32 0.0, %v496
    %498 = vdwg.mxu0
    %v503 = vunpack.c.l.b16 %v183
    %v504 = vunpack.c.l.b16 %v184
    %v505 = vunpack.c.l.b16 %v185
    %v506 = vunpack.c.l.b16 %v186
    %v507 = vpack.c.b16 %v504, %v503
    %v508 = vpack.c.b16 %v506, %v505
    %511 = vmatpush.bf16.msra.mxu0 0
    %512 = vmatpush.bf16.msra.mxu0 0
    %513 = vmatpush.bf16.msra.mxu0 0
    %514 = vmatpush.bf16.msra.mxu0 0
    %515 = vmatpush.bf16.msra.mxu0 0
    %516 = vmatpush.bf16.msra.mxu0 0
    %517 = vmatpush.bf16.msra.mxu0 %v508
    %518 = vmatpush.bf16.msra.mxu0 %v507
    %519 = vmatmul.bf16.gmra.mxu0 %v223
    %v520 = vpop.f32.mrf.mxu0
    %v521 = vadd.f32 0.0, %v520
    %v522 = vpop.f32.mrf.mxu0
    %v523 = vadd.f32 0.0, %v522
    %524 = vdwg.mxu0
    %v525 = vpack.c.bf16 %v235, %v235
    %v526 = vpack.c.bf16 %v237, %v237
    %v527 = vpack.c.bf16 %v261, %v261
    %v528 = vpack.c.bf16 %v263, %v263
    %v529 = vpack.c.bf16 %v287, %v287
    %v530 = vpack.c.bf16 %v289, %v289
    %v531 = vpack.c.bf16 %v313, %v313
    %v532 = vpack.c.bf16 %v315, %v315
    %v533 = vpack.c.bf16 %v339, %v339
    %v534 = vpack.c.bf16 %v341, %v341
    %v535 = vpack.c.bf16 %v365, %v365
    %v536 = vpack.c.bf16 %v367, %v367
    %v537 = vpack.c.bf16 %v391, %v391
    %v538 = vpack.c.bf16 %v393, %v393
    %v539 = vpack.c.bf16 %v417, %v417
    %v540 = vpack.c.bf16 %v419, %v419
    %v541 = vpack.c.bf16 %v443, %v443
    %v542 = vpack.c.bf16 %v445, %v445
    %v543 = vpack.c.bf16 %v469, %v469
    %v544 = vpack.c.bf16 %v471, %v471
    %v545 = vpack.c.bf16 %v495, %v495
    %v546 = vpack.c.bf16 %v497, %v497
    %v547 = vpack.c.bf16 %v521, %v521
    %v548 = vpack.c.bf16 %v523, %v523
    %v551 = vunpack.c.l.b16 %v525
    %v552 = vunpack.c.l.b16 %v526
    %v553 = vpack.c.b16 %v552, %v551
    %v556 = vunpack.c.l.b16 %v533
    %v557 = vunpack.c.l.b16 %v534
    %v558 = vpack.c.b16 %v557, %v556
    %vm559 = vcmask 64512
    %v561 = vsel %vm559, %v553, 0
    %v564 = vsel %vm559, %v558, 0
    %566 = vmatpush.bf16.xpose.msra.mxu0 0
    %567 = vmatpush.bf16.xpose.msra.mxu0 0
    %568 = vmatpush.bf16.xpose.msra.mxu0 0
    %569 = vmatpush.bf16.xpose.msra.mxu0 0
    %570 = vmatpush.bf16.xpose.msra.mxu0 0
    %571 = vmatpush.bf16.xpose.msra.mxu0 0
    %572 = vmatpush.bf16.xpose.msra.mxu0 0
    %573 = vmatpush.bf16.xpose.msra.mxu0 %v564
    %574 = vmatmul.bf16.gmra.mxu0 %v561
    %v575 = vpop.f32.mrf.mxu0
    %v576 = vadd.f32 %v197, %v575
    %v577 = vpop.f32.mrf.mxu0
    %v578 = vadd.f32 %v198, %v577
    %579 = vdwg.mxu0
    %v582 = vunpack.c.l.b16 %v527
    %v583 = vunpack.c.l.b16 %v528
    %v584 = vpack.c.b16 %v583, %v582
    %v587 = vunpack.c.l.b16 %v535
    %v588 = vunpack.c.l.b16 %v536
    %v589 = vpack.c.b16 %v588, %v587
    %v591 = vsel %vm559, %v584, 0
    %v594 = vsel %vm559, %v589, 0
    %596 = vmatpush.bf16.xpose.msra.mxu0 0
    %597 = vmatpush.bf16.xpose.msra.mxu0 0
    %598 = vmatpush.bf16.xpose.msra.mxu0 0
    %599 = vmatpush.bf16.xpose.msra.mxu0 0
    %600 = vmatpush.bf16.xpose.msra.mxu0 0
    %601 = vmatpush.bf16.xpose.msra.mxu0 0
    %602 = vmatpush.bf16.xpose.msra.mxu0 0
    %603 = vmatpush.bf16.xpose.msra.mxu0 %v594
    %604 = vmatmul.bf16.gmra.mxu0 %v591
    %v605 = vpop.f32.mrf.mxu0
    %v606 = vadd.f32 %v199, %v605
    %v607 = vpop.f32.mrf.mxu0
    %v608 = vadd.f32 %v200, %v607
    %609 = vdwg.mxu0
    %v612 = vunpack.c.l.b16 %v529
    %v613 = vunpack.c.l.b16 %v530
    %v614 = vpack.c.b16 %v613, %v612
    %v617 = vunpack.c.l.b16 %v537
    %v618 = vunpack.c.l.b16 %v538
    %v619 = vpack.c.b16 %v618, %v617
    %v621 = vsel %vm559, %v614, 0
    %v624 = vsel %vm559, %v619, 0
    %626 = vmatpush.bf16.xpose.msra.mxu0 0
    %627 = vmatpush.bf16.xpose.msra.mxu0 0
    %628 = vmatpush.bf16.xpose.msra.mxu0 0
    %629 = vmatpush.bf16.xpose.msra.mxu0 0
    %630 = vmatpush.bf16.xpose.msra.mxu0 0
    %631 = vmatpush.bf16.xpose.msra.mxu0 0
    %632 = vmatpush.bf16.xpose.msra.mxu0 0
    %633 = vmatpush.bf16.xpose.msra.mxu0 %v624
    %634 = vmatmul.bf16.gmra.mxu0 %v621
    %v635 = vpop.f32.mrf.mxu0
    %v636 = vadd.f32 %v201, %v635
    %v637 = vpop.f32.mrf.mxu0
    %v638 = vadd.f32 %v202, %v637
    %639 = vdwg.mxu0
    %v642 = vunpack.c.l.b16 %v531
    %v643 = vunpack.c.l.b16 %v532
    %v644 = vpack.c.b16 %v643, %v642
    %v647 = vunpack.c.l.b16 %v539
    %v648 = vunpack.c.l.b16 %v540
    %v649 = vpack.c.b16 %v648, %v647
    %v651 = vsel %vm559, %v644, 0
    %v654 = vsel %vm559, %v649, 0
    %656 = vmatpush.bf16.xpose.msra.mxu0 0
    %657 = vmatpush.bf16.xpose.msra.mxu0 0
    %658 = vmatpush.bf16.xpose.msra.mxu0 0
    %659 = vmatpush.bf16.xpose.msra.mxu0 0
    %660 = vmatpush.bf16.xpose.msra.mxu0 0
    %661 = vmatpush.bf16.xpose.msra.mxu0 0
    %662 = vmatpush.bf16.xpose.msra.mxu0 0
    %663 = vmatpush.bf16.xpose.msra.mxu0 %v654
    %664 = vmatmul.bf16.gmra.mxu0 %v651
    %v665 = vpop.f32.mrf.mxu0
    %v666 = vadd.f32 %v203, %v665
    %v667 = vpop.f32.mrf.mxu0
    %v668 = vadd.f32 %v204, %v667
    %669 = vdwg.mxu0
    %vm670 = vcmask 130048
    %v671 = vsel %vm670, %v576, -inf
    %672 = vmax.xlane.f32.xlu0 %v671
    %v673 = vpop.xlane.xlu0 %672
    %v674 = vsel %vm670, %v578, -inf
    %675 = vmax.xlane.f32.xlu0 %v674
    %v676 = vpop.xlane.xlu0 %675
    %v677 = vsel %vm670, %v606, -inf
    %678 = vmax.xlane.f32.xlu0 %v677
    %v679 = vpop.xlane.xlu0 %678
    %v680 = vsel %vm670, %v608, -inf
    %681 = vmax.xlane.f32.xlu0 %v680
    %v682 = vpop.xlane.xlu0 %681
    %v683 = vsel %vm670, %v636, -inf
    %684 = vmax.xlane.f32.xlu0 %v683
    %v685 = vpop.xlane.xlu0 %684
    %v686 = vsel %vm670, %v638, -inf
    %687 = vmax.xlane.f32.xlu0 %v686
    %v688 = vpop.xlane.xlu0 %687
    %v689 = vsel %vm670, %v666, -inf
    %690 = vmax.xlane.f32.xlu0 %v689
    %v691 = vpop.xlane.xlu0 %690
    %v692 = vsel %vm670, %v668, -inf
    %693 = vmax.xlane.f32.xlu0 %v692
    %v694 = vpop.xlane.xlu0 %693
    %v695 = vsub.f32 %v576, %v673
    %v696 = vsub.f32 %v578, %v676
    %v697 = vsub.f32 %v606, %v679
    %v698 = vsub.f32 %v608, %v682
    %v699 = vsub.f32 %v636, %v685
    %v700 = vsub.f32 %v638, %v688
    %v701 = vsub.f32 %v666, %v691
    %v702 = vsub.f32 %v668, %v694
    %v703 = vmul.f32 %v695, 1.442695
    %v704 = vpow.pop %v703
    %v705 = vmul.f32 %v696, 1.442695
    %v706 = vpow.pop %v705
    %v707 = vmul.f32 %v697, 1.442695
    %v708 = vpow.pop %v707
    %v709 = vmul.f32 %v698, 1.442695
    %v710 = vpow.pop %v709
    %v711 = vmul.f32 %v699, 1.442695
    %v712 = vpow.pop %v711
    %v713 = vmul.f32 %v700, 1.442695
    %v714 = vpow.pop %v713
    %v715 = vmul.f32 %v701, 1.442695
    %v716 = vpow.pop %v715
    %v717 = vmul.f32 %v702, 1.442695
    %v718 = vpow.pop %v717
    %v719 = vsel %vm670, %v704, 0.0
    %720 = vadd.xlane.f32.xlu0 %v719
    %v721 = vpop.xlane.xlu0 %720
    %v722 = vsel %vm670, %v706, 0.0
    %723 = vadd.xlane.f32.xlu0 %v722
    %v724 = vpop.xlane.xlu0 %723
    %v725 = vsel %vm670, %v708, 0.0
    %726 = vadd.xlane.f32.xlu0 %v725
    %v727 = vpop.xlane.xlu0 %726
    %v728 = vsel %vm670, %v710, 0.0
    %729 = vadd.xlane.f32.xlu0 %v728
    %v730 = vpop.xlane.xlu0 %729
    %v731 = vsel %vm670, %v712, 0.0
    %732 = vadd.xlane.f32.xlu0 %v731
    %v733 = vpop.xlane.xlu0 %732
    %v734 = vsel %vm670, %v714, 0.0
    %735 = vadd.xlane.f32.xlu0 %v734
    %v736 = vpop.xlane.xlu0 %735
    %v737 = vsel %vm670, %v716, 0.0
    %738 = vadd.xlane.f32.xlu0 %v737
    %v739 = vpop.xlane.xlu0 %738
    %v740 = vsel %vm670, %v718, 0.0
    %741 = vadd.xlane.f32.xlu0 %v740
    %v742 = vpop.xlane.xlu0 %741
    %v743 = vrcp.pop %v721
    %v744 = vmul.f32 %v721, %v743
    %v745 = vsub.f32 1.0, %v744
    %v746 = vmul.f32 %v743, %v745
    %v747 = vadd.f32 %v743, %v746
    %vm748 = vweird.f32 %v721
    %vm749 = vweird.f32 %v743
    %vm750 = vmor %vm748, %vm749
    %v751 = vsel %vm750, %v743, %v747
    %v752 = vand.u32 2147483647, %v721
    %vm753 = vcmp.eq.f32.partialorder %v752, 8.507059e+37
    %v754 = vand.u32 %v721, 2147483648
    %v755 = vor.u32 1.1754944e-38, %v754
    %v756 = vsel %vm753, %v755, %v751
    %v757 = vmul.f32 %v704, %v756
    %v758 = vrcp.pop %v724
    %v759 = vmul.f32 %v724, %v758
    %v760 = vsub.f32 1.0, %v759
    %v761 = vmul.f32 %v758, %v760
    %v762 = vadd.f32 %v758, %v761
    %vm763 = vweird.f32 %v724
    %vm764 = vweird.f32 %v758
    %vm765 = vmor %vm763, %vm764
    %v766 = vsel %vm765, %v758, %v762
    %v767 = vand.u32 2147483647, %v724
    %vm768 = vcmp.eq.f32.partialorder %v767, 8.507059e+37
    %v769 = vand.u32 %v724, 2147483648
    %v770 = vor.u32 1.1754944e-38, %v769
    %v771 = vsel %vm768, %v770, %v766
    %v772 = vmul.f32 %v706, %v771
    %v773 = vrcp.pop %v727
    %v774 = vmul.f32 %v727, %v773
    %v775 = vsub.f32 1.0, %v774
    %v776 = vmul.f32 %v773, %v775
    %v777 = vadd.f32 %v773, %v776
    %vm778 = vweird.f32 %v727
    %vm779 = vweird.f32 %v773
    %vm780 = vmor %vm778, %vm779
    %v781 = vsel %vm780, %v773, %v777
    %v782 = vand.u32 2147483647, %v727
    %vm783 = vcmp.eq.f32.partialorder %v782, 8.507059e+37
    %v784 = vand.u32 %v727, 2147483648
    %v785 = vor.u32 1.1754944e-38, %v784
    %v786 = vsel %vm783, %v785, %v781
    %v787 = vmul.f32 %v708, %v786
    %v788 = vrcp.pop %v730
    %v789 = vmul.f32 %v730, %v788
    %v790 = vsub.f32 1.0, %v789
    %v791 = vmul.f32 %v788, %v790
    %v792 = vadd.f32 %v788, %v791
    %vm793 = vweird.f32 %v730
    %vm794 = vweird.f32 %v788
    %vm795 = vmor %vm793, %vm794
    %v796 = vsel %vm795, %v788, %v792
    %v797 = vand.u32 2147483647, %v730
    %vm798 = vcmp.eq.f32.partialorder %v797, 8.507059e+37
    %v799 = vand.u32 %v730, 2147483648
    %v800 = vor.u32 1.1754944e-38, %v799
    %v801 = vsel %vm798, %v800, %v796
    %v802 = vmul.f32 %v710, %v801
    %v803 = vrcp.pop %v733
    %v804 = vmul.f32 %v733, %v803
    %v805 = vsub.f32 1.0, %v804
    %v806 = vmul.f32 %v803, %v805
    %v807 = vadd.f32 %v803, %v806
    %vm808 = vweird.f32 %v733
    %vm809 = vweird.f32 %v803
    %vm810 = vmor %vm808, %vm809
    %v811 = vsel %vm810, %v803, %v807
    %v812 = vand.u32 2147483647, %v733
    %vm813 = vcmp.eq.f32.partialorder %v812, 8.507059e+37
    %v814 = vand.u32 %v733, 2147483648
    %v815 = vor.u32 1.1754944e-38, %v814
    %v816 = vsel %vm813, %v815, %v811
    %v817 = vmul.f32 %v712, %v816
    %v818 = vrcp.pop %v736
    %v819 = vmul.f32 %v736, %v818
    %v820 = vsub.f32 1.0, %v819
    %v821 = vmul.f32 %v818, %v820
    %v822 = vadd.f32 %v818, %v821
    %vm823 = vweird.f32 %v736
    %vm824 = vweird.f32 %v818
    %vm825 = vmor %vm823, %vm824
    %v826 = vsel %vm825, %v818, %v822
    %v827 = vand.u32 2147483647, %v736
    %vm828 = vcmp.eq.f32.partialorder %v827, 8.507059e+37
    %v829 = vand.u32 %v736, 2147483648
    %v830 = vor.u32 1.1754944e-38, %v829
    %v831 = vsel %vm828, %v830, %v826
    %v832 = vmul.f32 %v714, %v831
    %v833 = vrcp.pop %v739
    %v834 = vmul.f32 %v739, %v833
    %v835 = vsub.f32 1.0, %v834
    %v836 = vmul.f32 %v833, %v835
    %v837 = vadd.f32 %v833, %v836
    %vm838 = vweird.f32 %v739
    %vm839 = vweird.f32 %v833
    %vm840 = vmor %vm838, %vm839
    %v841 = vsel %vm840, %v833, %v837
    %v842 = vand.u32 2147483647, %v739
    %vm843 = vcmp.eq.f32.partialorder %v842, 8.507059e+37
    %v844 = vand.u32 %v739, 2147483648
    %v845 = vor.u32 1.1754944e-38, %v844
    %v846 = vsel %vm843, %v845, %v841
    %v847 = vmul.f32 %v716, %v846
    %v848 = vrcp.pop %v742
    %v849 = vmul.f32 %v742, %v848
    %v850 = vsub.f32 1.0, %v849
    %v851 = vmul.f32 %v848, %v850
    %v852 = vadd.f32 %v848, %v851
    %vm853 = vweird.f32 %v742
    %vm854 = vweird.f32 %v848
    %vm855 = vmor %vm853, %vm854
    %v856 = vsel %vm855, %v848, %v852
    %v857 = vand.u32 2147483647, %v742
    %vm858 = vcmp.eq.f32.partialorder %v857, 8.507059e+37
    %v859 = vand.u32 %v742, 2147483648
    %v860 = vor.u32 1.1754944e-38, %v859
    %v861 = vsel %vm858, %v860, %v856
    %v862 = vmul.f32 %v718, %v861
    %v863 = vpack.c.bf16 %v757, %v757
    %v864 = vpack.c.bf16 %v772, %v772
    %v865 = vpack.c.bf16 %v787, %v787
    %v866 = vpack.c.bf16 %v802, %v802
    %v867 = vpack.c.bf16 %v817, %v817
    %v868 = vpack.c.bf16 %v832, %v832
    %v869 = vpack.c.bf16 %v847, %v847
    %v870 = vpack.c.bf16 %v862, %v862
    %v873 = vunpack.c.l.b16 %v863
    %v874 = vunpack.c.l.b16 %v864
    %v875 = vpack.c.b16 %v874, %v873
    %v878 = vunpack.c.l.b16 %v541
    %v879 = vunpack.c.l.b16 %v542
    %v880 = vpack.c.b16 %v879, %v878
    %v883 = vsel %vm670, %v875, 0
    %885 = vmatpush.bf16.msra.mxu0 0
    %886 = vmatpush.bf16.msra.mxu0 0
    %887 = vmatpush.bf16.msra.mxu0 0
    %888 = vmatpush.bf16.msra.mxu0 0
    %889 = vmatpush.bf16.msra.mxu0 0
    %890 = vmatpush.bf16.msra.mxu0 0
    %891 = vmatpush.bf16.msra.mxu0 0
    %892 = vmatpush.bf16.msra.mxu0 %v880
    %893 = vmatmul.bf16.gmra.mxu0 %v883
    %v894 = vpop.f32.mrf.mxu0
    %v895 = vadd.f32 0.0, %v894
    %v896 = vpop.f32.mrf.mxu0
    %v897 = vadd.f32 0.0, %v896
    %898 = vdwg.mxu0
    %v901 = vunpack.c.l.b16 %v865
    %v902 = vunpack.c.l.b16 %v866
    %v903 = vpack.c.b16 %v902, %v901
    %v906 = vunpack.c.l.b16 %v543
    %v907 = vunpack.c.l.b16 %v544
    %v908 = vpack.c.b16 %v907, %v906
    %v911 = vsel %vm670, %v903, 0
    %913 = vmatpush.bf16.msra.mxu0 0
    %914 = vmatpush.bf16.msra.mxu0 0
    %915 = vmatpush.bf16.msra.mxu0 0
    %916 = vmatpush.bf16.msra.mxu0 0
    %917 = vmatpush.bf16.msra.mxu0 0
    %918 = vmatpush.bf16.msra.mxu0 0
    %919 = vmatpush.bf16.msra.mxu0 0
    %920 = vmatpush.bf16.msra.mxu0 %v908
    %921 = vmatmul.bf16.gmra.mxu0 %v911
    %v922 = vpop.f32.mrf.mxu0
    %v923 = vadd.f32 0.0, %v922
    %v924 = vpop.f32.mrf.mxu0
    %v925 = vadd.f32 0.0, %v924
    %926 = vdwg.mxu0
    %v929 = vunpack.c.l.b16 %v867
    %v930 = vunpack.c.l.b16 %v868
    %v931 = vpack.c.b16 %v930, %v929
    %v934 = vunpack.c.l.b16 %v545
    %v935 = vunpack.c.l.b16 %v546
    %v936 = vpack.c.b16 %v935, %v934
    %v939 = vsel %vm670, %v931, 0
    %941 = vmatpush.bf16.msra.mxu0 0
    %942 = vmatpush.bf16.msra.mxu0 0
    %943 = vmatpush.bf16.msra.mxu0 0
    %944 = vmatpush.bf16.msra.mxu0 0
    %945 = vmatpush.bf16.msra.mxu0 0
    %946 = vmatpush.bf16.msra.mxu0 0
    %947 = vmatpush.bf16.msra.mxu0 0
    %948 = vmatpush.bf16.msra.mxu0 %v936
    %949 = vmatmul.bf16.gmra.mxu0 %v939
    %v950 = vpop.f32.mrf.mxu0
    %v951 = vadd.f32 0.0, %v950
    %v952 = vpop.f32.mrf.mxu0
    %v953 = vadd.f32 0.0, %v952
    %954 = vdwg.mxu0
    %v957 = vunpack.c.l.b16 %v869
    %v958 = vunpack.c.l.b16 %v870
    %v959 = vpack.c.b16 %v958, %v957
    %v962 = vunpack.c.l.b16 %v547
    %v963 = vunpack.c.l.b16 %v548
    %v964 = vpack.c.b16 %v963, %v962
    %v967 = vsel %vm670, %v959, 0
    %969 = vmatpush.bf16.msra.mxu0 0
    %970 = vmatpush.bf16.msra.mxu0 0
    %971 = vmatpush.bf16.msra.mxu0 0
    %972 = vmatpush.bf16.msra.mxu0 0
    %973 = vmatpush.bf16.msra.mxu0 0
    %974 = vmatpush.bf16.msra.mxu0 0
    %975 = vmatpush.bf16.msra.mxu0 0
    %976 = vmatpush.bf16.msra.mxu0 %v964
    %977 = vmatmul.bf16.gmra.mxu0 %v967
    %v978 = vpop.f32.mrf.mxu0
    %v979 = vadd.f32 0.0, %v978
    %v980 = vpop.f32.mrf.mxu0
    %v981 = vadd.f32 0.0, %v980
    %982 = vdwg.mxu0
    %v983 = vpack.c.bf16 %v895, %v895
    %v984 = vpack.c.bf16 %v897, %v897
    %v985 = vpack.c.bf16 %v923, %v923
    %v986 = vpack.c.bf16 %v925, %v925
    %v987 = vpack.c.bf16 %v951, %v951
    %v988 = vpack.c.bf16 %v953, %v953
    %v989 = vpack.c.bf16 %v979, %v979
    %v990 = vpack.c.bf16 %v981, %v981
    %v993 = vunpack.c.l.b16 %v983
    %v994 = vunpack.c.l.b16 %v984
    %v995 = vpack.c.b16 %v994, %v993
    %v997 = vsel %vm559, %v995, 0
    %vm999 = vcmask 1043456
    %v1001 = vsel %vm999, %v192, 0
    %1003 = vmatpush.bf16.msra.mxu0 0
    %1004 = vmatpush.bf16.msra.mxu0 0
    %1005 = vmatpush.bf16.msra.mxu0 0
    %1006 = vmatpush.bf16.msra.mxu0 0
    %1007 = vmatpush.bf16.msra.mxu0 0
    %1008 = vmatpush.bf16.msra.mxu0 0
    %1009 = vmatpush.bf16.msra.mxu0 0
    %1010 = vmatpush.bf16.msra.mxu0 %v1001
    %1011 = vmatmul.bf16.gmra.mxu0 %v997
    %v1012 = vpop.f32.mrf.mxu0
    %v1013 = vadd.f32 0.0, %v1012
    %v1014 = vpop.f32.mrf.mxu0
    %v1015 = vadd.f32 0.0, %v1014
    %1016 = vdwg.mxu0
    %v1019 = vunpack.c.l.b16 %v985
    %v1020 = vunpack.c.l.b16 %v986
    %v1021 = vpack.c.b16 %v1020, %v1019
    %v1023 = vsel %vm559, %v1021, 0
    %v1026 = vsel %vm999, %v193, 0
    %1028 = vmatpush.bf16.msra.mxu0 0
    %1029 = vmatpush.bf16.msra.mxu0 0
    %1030 = vmatpush.bf16.msra.mxu0 0
    %1031 = vmatpush.bf16.msra.mxu0 0
    %1032 = vmatpush.bf16.msra.mxu0 0
    %1033 = vmatpush.bf16.msra.mxu0 0
    %1034 = vmatpush.bf16.msra.mxu0 0
    %1035 = vmatpush.bf16.msra.mxu0 %v1026
    %1036 = vmatmul.bf16.gmra.mxu0 %v1023
    %v1037 = vpop.f32.mrf.mxu0
    %v1038 = vadd.f32 0.0, %v1037
    %v1039 = vpop.f32.mrf.mxu0
    %v1040 = vadd.f32 0.0, %v1039
    %1041 = vdwg.mxu0
    %v1044 = vunpack.c.l.b16 %v987
    %v1045 = vunpack.c.l.b16 %v988
    %v1046 = vpack.c.b16 %v1045, %v1044
    %v1048 = vsel %vm559, %v1046, 0
    %v1051 = vsel %vm999, %v194, 0
    %1053 = vmatpush.bf16.msra.mxu0 0
    %1054 = vmatpush.bf16.msra.mxu0 0
    %1055 = vmatpush.bf16.msra.mxu0 0
    %1056 = vmatpush.bf16.msra.mxu0 0
    %1057 = vmatpush.bf16.msra.mxu0 0
    %1058 = vmatpush.bf16.msra.mxu0 0
    %1059 = vmatpush.bf16.msra.mxu0 0
    %1060 = vmatpush.bf16.msra.mxu0 %v1051
    %1061 = vmatmul.bf16.gmra.mxu0 %v1048
    %v1062 = vpop.f32.mrf.mxu0
    %v1063 = vadd.f32 0.0, %v1062
    %v1064 = vpop.f32.mrf.mxu0
    %v1065 = vadd.f32 0.0, %v1064
    %1066 = vdwg.mxu0
    %v1069 = vunpack.c.l.b16 %v989
    %v1070 = vunpack.c.l.b16 %v990
    %v1071 = vpack.c.b16 %v1070, %v1069
    %v1073 = vsel %vm559, %v1071, 0
    %v1076 = vsel %vm999, %v195, 0
    %1078 = vmatpush.bf16.msra.mxu0 0
    %1079 = vmatpush.bf16.msra.mxu0 0
    %1080 = vmatpush.bf16.msra.mxu0 0
    %1081 = vmatpush.bf16.msra.mxu0 0
    %1082 = vmatpush.bf16.msra.mxu0 0
    %1083 = vmatpush.bf16.msra.mxu0 0
    %1084 = vmatpush.bf16.msra.mxu0 0
    %1085 = vmatpush.bf16.msra.mxu0 %v1076
    %1086 = vmatmul.bf16.gmra.mxu0 %v1073
    %v1087 = vpop.f32.mrf.mxu0
    %v1088 = vadd.f32 0.0, %v1087
    %v1089 = vpop.f32.mrf.mxu0
    %v1090 = vadd.f32 0.0, %v1089
    %1091 = vdwg.mxu0
    %v1092 = vsel %vm49, %v1013, 0.0
    %v1093 = vsel %vm49, %v1038, 0.0
    %v1094 = vadd.f32 %v1092, %v1093
    %v1095 = vsel %vm49, %v1063, 0.0
    %v1096 = vadd.f32 %v1094, %v1095
    %v1097 = vsel %vm49, %v1088, 0.0
    %v1098 = vadd.f32 %v1096, %v1097
    %v1099 = vsel %vm49, %v1015, 0.0
    %v1100 = vsel %vm49, %v1040, 0.0
    %v1101 = vadd.f32 %v1099, %v1100
    %v1102 = vsel %vm49, %v1065, 0.0
    %v1103 = vadd.f32 %v1101, %v1102
    %v1104 = vsel %vm49, %v1090, 0.0
    %v1105 = vadd.f32 %v1103, %v1104
    %v1106 = vadd.f32 %v45, %v1098
    %v1107 = vadd.f32 %v46, %v1105
    %1108 = vst.msk [vmem:[#allocation7] sm:$0xff] %vm49, %v1106
    %1109 = vst.msk [vmem:[#allocation7 + $0x8] sm:$0xff] %vm49, %v1107
    // Predicated region
    $region18: #{tpu_custom_call.1} parent=1 // pred_check
      _
    $region19: #{tpu_custom_call.1} parent=1 // pred_check_branch
      %1111 = sbr.rel (0) target = $region21
    $region20: #{tpu_custom_call.1} parent=1 // pred_region
      %1113 = vsyncadd [#allocation4], 0
      %s1114 = sshll.u32 [#allocation7], 4
      %s1115 = int_to_ptr.vmem [resolvable:$true] %s1114
      %s1116 = sshll.u32 %s2, 4
      %s1117 = int_to_ptr.hbm [resolvable:$true] %s1116
      %1122 = dma.vmem_to_hbm [thread:$0]  %s1115, 256, %s1117, [#allocation4], 128, 128, 8
    $region21: #{tpu_custom_call.1} parent=1 // pred_fallthru
      _
    // Predicated region
    $region22: #{tpu_custom_call.1} parent=1 // pred_check
      _
    $region23: #{tpu_custom_call.1} parent=1 // pred_check_branch
      %1124 = sbr.rel (0) target = $region25
    $region24: #{tpu_custom_call.1} parent=1 // pred_region
      %1126 = dma.done [#allocation4], 256
    $region25: #{tpu_custom_call.1} parent=1 // pred_fallthru
      _
    %1127 = vsyncpa [#allocation3], 1
    %1128 = vsyncpa [#allocation6], 1
    %1129 = vsyncpa [#allocation4], 1

</llo_original>
